<compile_context>
chip_gen: v5e
topology: v5e:2x2
jax: 0.10.0
libtpu: 0.0.40
codegen_flags: <defaults>
</compile_context>

<pallas_src>
import math

import jax
import jax.numpy as jnp
from jax.experimental import pallas as pl
from jax.experimental.pallas import tpu as pltpu


def build_pe_tables(d_model: int, max_len: int = 50):
    """Deterministic sin/cos tables, matching the PyTorch __init__ exactly.

    rowPE[i, j, :] = PE(j)   (depends on the column index)
    colPE[i, j, :] = PE(i)   (depends on the row index)
    """
    assert d_model % 2 == 0, "d_model must be even (same limitation as the PyTorch module)"
    position = jnp.arange(max_len, dtype=jnp.float32)[:, None]          # (L, 1)
    div_term = jnp.exp(
        jnp.arange(0, d_model, 2, dtype=jnp.float32)
        * (-(math.log(10000.0) / d_model))
    )                                                                   # (D/2,)
    pe1d = jnp.zeros((max_len, d_model), dtype=jnp.float32)
    pe1d = pe1d.at[:, 0::2].set(jnp.sin(position * div_term))
    pe1d = pe1d.at[:, 1::2].set(jnp.cos(position * div_term))
    rowPE = jnp.broadcast_to(pe1d[None, :, :], (max_len, max_len, d_model))
    colPE = jnp.broadcast_to(pe1d[:, None, :], (max_len, max_len, d_model))
    return rowPE, colPE


def _pe_add_kernel(x_ref, pe_ref, o_ref):
    # x_ref / o_ref: (TB, gs*dim)  lane-dense tile of batch rows
    # pe_ref:        (1,  gs*dim)  combined (row+col) PE, constant index_map so
    #                              it stays VMEM-resident; sublane-broadcast add
    o_ref[...] = x_ref[...] + pe_ref[...]


def _pick_batch_tile(bs: int, row_bytes: int, target_bytes: int = 4 << 20) -> int:
    """Largest batch tile with x-block ~target_bytes; multiple of 8 sublanes
    (or the whole batch if it already fits in one block)."""
    max_rows = max(1, target_bytes // max(row_bytes, 1))
    if bs <= max_rows:
        return bs                       # single block covers the batch axis
    return min(bs, max(8, (max_rows // 8) * 8))


def positional_encoding_forward(x, rowPE, colPE, dropout_p=0.1):
    """Forward pass of PositionalEncoding (eval mode: dropout = identity)."""
    bs, gs, dim = x.shape
    s = int(math.isqrt(gs))
    assert s * s == gs, "gs must be a perfect square"

    # __init__ / glue: slice, pre-sum the two PE tables, flatten lane-dense.
    pe_flat = (rowPE[:s, :s, :dim] + colPE[:s, :s, :dim]).astype(x.dtype)
    pe_flat = pe_flat.reshape(1, gs * dim)          # (1, gs*dim)
    x2d = x.reshape(bs, gs * dim)                   # (bs, gs*dim), row-major no-op

    n = gs * dim
    row_bytes = n * jnp.dtype(x.dtype).itemsize
    tb = _pick_batch_tile(bs, row_bytes)
    grid = (pl.cdiv(bs, tb),)

    out2d = pl.pallas_call(
        _pe_add_kernel,
        out_shape=jax.ShapeDtypeStruct((bs, n), x.dtype),
        grid_spec=pltpu.PrefetchScalarGridSpec(
            num_scalar_prefetch=0,
            grid=grid,
            in_specs=[
                pl.BlockSpec((tb, n), lambda b: (b, 0)),   # batch tile of x
                pl.BlockSpec((1, n), lambda b: (0, 0)),    # PE stays resident
            ],
            out_specs=pl.BlockSpec((tb, n), lambda b: (b, 0)),
        ),
        compiler_params=pltpu.CompilerParams(
            dimension_semantics=("parallel",),   # batch axis -> megacore on v7x
        ),
    )(x2d, pe_flat)

    # TODO(synk): training-mode dropout (random mask) is not applied; eval-mode
    # nn.Dropout is the identity, which is what we reproduce here.
    return out2d.reshape(bs, gs, dim)


if __name__ == "__main__":
    d_model = 32
    max_len = 50
    dropout_p = 0.1
    bs = 2
    s = 4
    gs = s * s  # 16

    key = jax.random.PRNGKey(0)
    x = jax.random.normal(key, (bs, gs, d_model), dtype=jnp.float32)

    rowPE, colPE = build_pe_tables(d_model, max_len)

    out = positional_encoding_forward(x, rowPE, colPE, dropout_p)
    out = jax.block_until_ready(out)

    # Pure-JAX reference check.
    feat = x.reshape(bs, s, s, d_model)
    ref = feat + rowPE[None, :s, :s, :d_model] + colPE[None, :s, :s, :d_model]
    ref = ref.reshape(bs, gs, d_model)
    assert jnp.allclose(out, ref, atol=1e-6), "mismatch vs reference"

    print("KERNEL_OK")
</pallas_src>

<mosaic_0001>
module attributes {stable_mosaic.version = 11 : i64} {
  func.func @_pe_add_kernel(%arg0: i32, %arg1: memref<2x512xf32, #tpu.memory_space<vmem>>, %arg2: memref<1x512xf32, #tpu.memory_space<vmem>>, %arg3: memref<2x512xf32, #tpu.memory_space<vmem>>) attributes {dimension_semantics = [#tpu.dimension_semantics<parallel>], iteration_bounds = array<i64: 1>, scalar_prefetch = 0 : i64, scratch_operands = 0 : i64, tpu.core_type = #tpu.core_type<tc>, window_params = [{transform_indices = @transform_0, window_bounds = array<i64: 2, 512>}, {pipeline_mode = #tpu.pipeline_mode<synchronous>, transform_indices = @transform_1, window_bounds = array<i64: 1, 512>}, {transform_indices = @transform_2, window_bounds = array<i64: 2, 512>}]} {
    %c0 = arith.constant 0 : index
    %c0_0 = arith.constant 0 : index
    %0 = vector.load %arg1[%c0, %c0_0] : memref<2x512xf32, #tpu.memory_space<vmem>>, vector<2x512xf32>
    %c0_1 = arith.constant 0 : index
    %c0_2 = arith.constant 0 : index
    %1 = vector.load %arg2[%c0_1, %c0_2] : memref<1x512xf32, #tpu.memory_space<vmem>>, vector<1x512xf32>
    %2 = vector.broadcast %1 : vector<1x512xf32> to vector<2x512xf32>
    %3 = arith.addf %0, %2 : vector<2x512xf32>
    %c0_3 = arith.constant 0 : index
    %c0_4 = arith.constant 0 : index
    %4 = vector.load %arg3[%c0_3, %c0_4] : memref<2x512xf32, #tpu.memory_space<vmem>>, vector<2x512xf32>
    tpu.vector_store %arg3[%c0_3, %c0_4], %3 {strides = array<i32>} : memref<2x512xf32, #tpu.memory_space<vmem>>, vector<2x512xf32>,
    return
  }
  func.func @transform_0(%arg0: i32) -> (i32, i32) {
    %c0_i32 = arith.constant 0 : i32
    %c0_i32_0 = arith.constant 0 : i32
    return %arg0, %c0_i32 : i32, i32
  }
  func.func @transform_1(%arg0: i32) -> (i32, i32) {
    %c0_i32 = arith.constant 0 : i32
    %c0_i32_0 = arith.constant 0 : i32
    %c0_i32_1 = arith.constant 0 : i32
    return %c0_i32, %c0_i32_0 : i32, i32
  }
  func.func @transform_2(%arg0: i32) -> (i32, i32) {
    %c0_i32 = arith.constant 0 : i32
    %c0_i32_0 = arith.constant 0 : i32
    return %arg0, %c0_i32 : i32, i32
  }
}

</mosaic_0001>

<llo_original>
// kernel: tpu_custom_call.1
$region0: #{tpu_custom_call.1}
  #allocation0 [shape = 'u32[]', space=smem, size = 0x4, offset = 0x4, fixed_abs, tag = 'smem constant byte address 0x4 - core index']
  #allocation1 [shape = 'u32[72,128]{1,0:T(1,128)}', space=vmem, size = 0x9000, scoped, tag = 'internal scratch']
  %s0 = inlined_call_operand.hbm [shape: f32[2,512], index: 0, kind: input, shape index: {}]
  %s1 = inlined_call_operand.hbm [shape: f32[1,512], index: 1, kind: input, shape index: {}]
  %s2 = inlined_call_operand.hbm [shape: f32[2,512], index: 2, kind: output, shape index: {}]
  %s3 = sld [smem:[#allocation0]]
  $region26: #{tpu_custom_call.1} parent=0
    _
  %s5 = ssub.s32 1, %s3
  %s6 = scalar_select 0, %s5, %s3
  $region1: #{tpu_custom_call.1} parent=0
    #allocation2 [shape = 'u8[4096]{0}', space=vmem, size = 0x1000, scoped, tag = 'input window, operand 0, single buffered']
    #allocation3 [shape = 's32[1]{0}', space=sflag, size = 0x4, scoped, tag = 'scoped memory for tpu_custom_call.1']
    #allocation4 [shape = 's32[1]{0}', space=sflag, size = 0x4, scoped, tag = 'scoped memory for tpu_custom_call.1']
    #allocation5 [shape = 'u8[2048]{0}', space=vmem, size = 0x800, scoped, tag = 'input window, operand 1, single buffered']
    #allocation6 [shape = 's32[1]{0}', space=sflag, size = 0x4, scoped, tag = 'scoped memory for tpu_custom_call.1']
    #allocation7 [shape = 'u8[4096]{0}', space=vmem, size = 0x1000, scoped, tag = 'output window, operand 0, single buffered']
    %7 = vsyncpa [#allocation3], 0
    %8 = vsyncpa [#allocation6], 0
    %9 = vsyncpa [#allocation4], 0
    // Predicated region
    $region2: #{tpu_custom_call.1} parent=1 // pred_check
      _
    $region3: #{tpu_custom_call.1} parent=1 // pred_check_branch
      %11 = sbr.rel (0) target = $region5
    $region4: #{tpu_custom_call.1} parent=1 // pred_region
      %13 = vsyncadd [#allocation3], 0
      %s15 = sshll.u32 %s0, 4
      %s16 = int_to_ptr.hbm [resolvable:$true] %s15
      %s17 = sshll.u32 [#allocation2], 4
      %s18 = int_to_ptr.vmem [resolvable:$true] %s17
      %20 = dma.hbm_to_vmem [thread:$0]  %s16, 128, %s18, [#allocation3]
    $region5: #{tpu_custom_call.1} parent=1 // pred_fallthru
      _
    // Predicated region
    $region6: #{tpu_custom_call.1} parent=1 // pred_check
      _
    $region7: #{tpu_custom_call.1} parent=1 // pred_check_branch
      %22 = sbr.rel (0) target = $region9
    $region8: #{tpu_custom_call.1} parent=1 // pred_region
      %24 = vsyncadd [#allocation6], 0
      %s26 = sshll.u32 %s1, 4
      %s27 = int_to_ptr.hbm [resolvable:$true] %s26
      %s28 = sshll.u32 [#allocation5], 4
      %s29 = int_to_ptr.vmem [resolvable:$true] %s28
      %31 = dma.hbm_to_vmem [thread:$0]  %s27, 64, %s29, [#allocation6]
    $region9: #{tpu_custom_call.1} parent=1 // pred_fallthru
      _
    // Predicated region
    $region10: #{tpu_custom_call.1} parent=1 // pred_check
      _
    $region11: #{tpu_custom_call.1} parent=1 // pred_check_branch
      %33 = sbr.rel (0) target = $region13
    $region12: #{tpu_custom_call.1} parent=1 // pred_region
      %35 = dma.done [#allocation3], 128
    $region13: #{tpu_custom_call.1} parent=1 // pred_fallthru
      _
    // Predicated region
    $region14: #{tpu_custom_call.1} parent=1 // pred_check
      _
    $region15: #{tpu_custom_call.1} parent=1 // pred_check_branch
      %37 = sbr.rel (0) target = $region17
    $region16: #{tpu_custom_call.1} parent=1 // pred_region
      %39 = dma.done [#allocation6], 64
    $region17: #{tpu_custom_call.1} parent=1 // pred_fallthru
      _
    %v40 = vld [vmem:[#allocation2] sm:$0xff]
    %v41 = vld [vmem:[#allocation5] sm:$0xf]
    %v43 = vperm.slane %v41, 0
    %v44 = vperm.slane %v41, 1
    %v45 = vperm.slane %v41, 2
    %v46 = vperm.slane %v41, 3
    %v47 = vrot.slane %v44, 6
    %v48 = vrot.slane %v45, 4
    %v49 = vrot.slane %v46, 2
    %vm50 = vcmask 1041408
    %v51 = vsel %vm50, %v43, %v47
    %vm52 = vcmask 1045508
    %v53 = vsel %vm52, %v48, %v49
    %vm54 = vcmask 1043456
    %v55 = vsel %vm54, %v51, %v53
    %v57 = vadd.f32 %v40, %v55
    %58 = vst [vmem:[#allocation7] sm:$0xff] %v57
    // Predicated region
    $region18: #{tpu_custom_call.1} parent=1 // pred_check
      _
    $region19: #{tpu_custom_call.1} parent=1 // pred_check_branch
      %60 = sbr.rel (0) target = $region21
    $region20: #{tpu_custom_call.1} parent=1 // pred_region
      %62 = vsyncadd [#allocation4], 0
      %s64 = sshll.u32 [#allocation7], 4
      %s65 = int_to_ptr.vmem [resolvable:$true] %s64
      %s66 = sshll.u32 %s2, 4
      %s67 = int_to_ptr.hbm [resolvable:$true] %s66
      %69 = dma.vmem_to_hbm [thread:$0]  %s65, 128, %s67, [#allocation4]
    $region21: #{tpu_custom_call.1} parent=1 // pred_fallthru
      _
    // Predicated region
    $region22: #{tpu_custom_call.1} parent=1 // pred_check
      _
    $region23: #{tpu_custom_call.1} parent=1 // pred_check_branch
      %71 = sbr.rel (0) target = $region25
    $region24: #{tpu_custom_call.1} parent=1 // pred_region
      %73 = dma.done [#allocation4], 128
    $region25: #{tpu_custom_call.1} parent=1 // pred_fallthru
      _
    %74 = vsyncpa [#allocation3], 1
    %75 = vsyncpa [#allocation6], 1
    %76 = vsyncpa [#allocation4], 1

</llo_original>
